<compile_context>
chip_gen: v7x
topology: tpu7x:2x2x1
jax: 0.10.0
libtpu: 0.0.40
codegen_flags: <defaults>
</compile_context>

<pallas_src>
import jax
import jax.numpy as jnp
from jax import lax
from jax.experimental import pallas as pl
from jax.experimental.pallas import tpu as pltpu


# ----------------------------------------------------------------------------
# Kernel 1: duration predictor — one sequence (batch element) per grid step.
# ----------------------------------------------------------------------------
def _duration_predictor_kernel(x_ref, w1_ref, w2_ref, vec_ref, out_ref):
    T, D = x_ref.shape[1], x_ref.shape[2]
    h0 = x_ref[0].astype(jnp.float32)                    # [T, D]
    t_idx = lax.broadcasted_iota(jnp.int32, (T, 1), 0)
    keep_prev = t_idx != 0                               # zero the t==0 tap
    keep_next = t_idx != T - 1                           # zero the t==T-1 tap
    v = vec_ref[...]                                     # [8, F] f32 packed vectors

    def conv_relu_ln(h, w_ref, bias, gamma, beta):
        # 'same' conv k=3, pad=1: gather taps with sublane rotations; the rows
        # that wrap around the sequence edge are exactly the padded (t==0 /
        # t==T-1) rows, which the edge masks zero out.
        zero = jnp.zeros_like(h)
        prev = jnp.where(keep_prev, pltpu.roll(h, shift=1, axis=0), zero)
        nxt = jnp.where(keep_next, pltpu.roll(h, shift=T - 1, axis=0), zero)
        # bf16 MXU operands, f32 accumulation.
        hcat = jnp.concatenate([prev, h, nxt], axis=-1).astype(jnp.bfloat16)
        acc = jnp.dot(hcat, w_ref[...], preferred_element_type=jnp.float32)
        acc = jnp.maximum(acc + bias, 0.0)               # bias + ReLU (f32)
        # LayerNorm, one-pass variance, f32 statistics.
        mu = jnp.mean(acc, axis=-1, keepdims=True)
        e2 = jnp.mean(acc * acc, axis=-1, keepdims=True)
        var = jnp.maximum(e2 - mu * mu, 0.0)
        return (acc - mu) * lax.rsqrt(var + 1e-5) * gamma + beta

    h1 = conv_relu_ln(h0, w1_ref, v[0:1, :], v[1:2, :], v[2:3, :])
    # TODO(synk): dropout omitted (eval-mode identity).
    h2 = conv_relu_ln(h1, w2_ref, v[3:4, :], v[4:5, :], v[5:6, :])
    # Linear(F, 1): VPU multiply + lane reduce instead of an N=1 MXU matmul.
    dur = jnp.sum(h2 * v[6:7, :], axis=-1, keepdims=True) + v[7:8, 0:1]  # [T,1]
    out_ref[0] = dur


def duration_predictor(x, params):
    B, T, D = x.shape
    w1 = params["w1f"].astype(jnp.bfloat16)
    w2 = params["w2f"].astype(jnp.bfloat16)
    vecs = params["vecs"].astype(jnp.float32)
    F_ = w1.shape[-1]

    xit = jnp.dtype(x.dtype).itemsize
    # Per-grid-step footprint: double-buffered x/out blocks + weights + the
    # in-kernel temporaries (f32 taps, bf16 hcat, f32 activations).
    blk = (2 * T * D * xit
           + 2 * (w1.size * 2 + w2.size * 2 + vecs.size * 4)
           + 2 * T * 4
           + T * (3 * D * 4 + 3 * D * 2 + 3 * F_ * 2 + 6 * F_ * 4))
    vmem_limit = int(min(max(2 * blk, 4 * 2**20), 40 * 2**20))

    flops = 2 * B * T * (3 * D * F_ + 3 * F_ * F_ + F_)
    bytes_accessed = (x.size * xit + w1.size * 2 + w2.size * 2
                      + vecs.size * 4 + B * T * 4)

    dur = pl.pallas_call(
        _duration_predictor_kernel,
        out_shape=jax.ShapeDtypeStruct((B, T, 1), jnp.float32),
        grid=(B,),
        in_specs=[
            pl.BlockSpec((1, T, D), lambda b: (b, 0, 0)),
            pl.BlockSpec((3 * D, F_), lambda b: (0, 0)),
            pl.BlockSpec((3 * F_, F_), lambda b: (0, 0)),
            pl.BlockSpec((8, F_), lambda b: (0, 0)),
        ],
        out_specs=pl.BlockSpec((1, T, 1), lambda b: (b, 0, 0)),
        compiler_params=pltpu.CompilerParams(
            dimension_semantics=("parallel",),
            vmem_limit_bytes=vmem_limit),
        cost_estimate=pl.CostEstimate(flops=int(flops), transcendentals=2 * B * T,
                                      bytes_accessed=int(bytes_accessed)),
    )(x, w1, w2, vecs)
    return dur.reshape(B, T)


# ----------------------------------------------------------------------------
# Kernel 2: LR — build a (tm, T) slice of the 0/1 alignment from precomputed
#           start offsets + durations and do out = align @ x,
#           one (batch, mel-tile) per grid step.
# ----------------------------------------------------------------------------
def _lr_kernel(dur_ref, start_ref, x_ref, out_ref):
    T = dur_ref.shape[1]
    tm = out_ref.shape[1]

    d = dur_ref[...]                                     # [1, T] int32 (>= 0)
    start = start_ref[...]                               # [1, T] int32 (exclusive cumsum)

    # Mel frame indices handled by this (batch, mel-tile) grid step.
    m0 = pl.program_id(1) * tm
    m = lax.broadcasted_iota(jnp.int32, (tm, T), 0) + m0
    # Single unsigned compare: m in [start, start+d)  <=>  (m - start) u< d.
    diff = pltpu.bitcast(m - start, jnp.uint32)
    width = pltpu.bitcast(d, jnp.uint32)
    align = (diff < width).astype(jnp.bfloat16)          # 0/1 exact in bf16
    xb = x_ref[0].astype(jnp.bfloat16)                   # bf16 MXU operand
    out = jnp.dot(align, xb, preferred_element_type=jnp.float32)
    out_ref[0] = out.astype(out_ref.dtype)


def length_regulate(x, durations, mel_max_length):
    B, T, D = x.shape
    M = int(mel_max_length)

    dur = durations.astype(jnp.int32)
    csum = jnp.cumsum(dur, axis=-1)
    start = (csum - dur).astype(jnp.int32)               # exclusive prefix sum

    itemsize = jnp.dtype(x.dtype).itemsize

    def tile_bytes(tm):
        # double-buffered x / dur / start / out blocks + kernel temporaries
        return (2 * T * D * itemsize + 4 * T * 4 + 2 * tm * D * itemsize
                + tm * T * 6 + T * D * 2 + tm * D * 4)

    # Largest mel tile (among 512..8) dividing M that fits a ~32 MiB footprint;
    # big tiles keep the copy/gather near the HBM roofline and amortize the
    # ~0.35 us per-grid-step overhead.  For best perf pad M to a multiple of
    # 512 (at least 128) upstream.
    if M % 8 == 0:
        tm = 8
        for cand in (512, 256, 128, 64, 32, 16, 8):
            if M % cand == 0 and tile_bytes(cand) <= 32 * 2**20:
                tm = cand
                break
    else:
        tm = M   # full-dim block is always legal

    # Cap the VMEM request at 40 MiB (v7x has only 64 MiB physical per TC);
    # no artificial floor for small problems.
    vmem_limit = int(min(max(2 * tile_bytes(tm), 4 * 2**20), 40 * 2**20))

    return pl.pallas_call(
        _lr_kernel,
        out_shape=jax.ShapeDtypeStruct((B, M, D), x.dtype),
        grid=(B, M // tm),                    # mel tiles innermost: dur/start/x reused
        in_specs=[
            pl.BlockSpec((1, T), lambda b, mt: (b, 0)),
            pl.BlockSpec((1, T), lambda b, mt: (b, 0)),
            pl.BlockSpec((1, T, D), lambda b, mt: (b, 0, 0)),
        ],
        out_specs=pl.BlockSpec((1, tm, D), lambda b, mt: (b, mt, 0)),
        compiler_params=pltpu.CompilerParams(
            dimension_semantics=("parallel", "parallel"),
            vmem_limit_bytes=vmem_limit),
        cost_estimate=pl.CostEstimate(
            flops=2 * B * M * T * D, transcendentals=0,
            bytes_accessed=int(x.size * itemsize + 2 * B * T * 4
                               + B * M * D * itemsize)),
    )(dur, start, x)


# ----------------------------------------------------------------------------
# Module wrapper (glue) + parameter packing
# ----------------------------------------------------------------------------
def init_params(key, d_model=32, filt=32):
    k0, k1, k2 = jax.random.split(key, 3)
    s = 0.02
    D, F = d_model, filt
    w1 = jax.random.normal(k0, (3, D, F), jnp.float32) * s   # [tap, in, out]
    w2 = jax.random.normal(k1, (3, F, F), jnp.float32) * s
    wl = jax.random.normal(k2, (F,), jnp.float32) * s        # Linear(F, 1) weight row
    vecs = jnp.stack([
        jnp.zeros((F,), jnp.float32),   # 0: conv1 bias
        jnp.ones((F,), jnp.float32),    # 1: ln1 gamma
        jnp.zeros((F,), jnp.float32),   # 2: ln1 beta
        jnp.zeros((F,), jnp.float32),   # 3: conv2 bias
        jnp.ones((F,), jnp.float32),    # 4: ln2 gamma
        jnp.zeros((F,), jnp.float32),   # 5: ln2 beta
        wl,                             # 6: linear weight
        jnp.zeros((F,), jnp.float32),   # 7: linear bias (scalar in [7, 0])
    ], axis=0)                          # [8, F] f32
    return {
        # == torch conv.weight.permute(2, 1, 0).reshape(3*in, out), stored bf16
        # (MXU operands); accumulation and LayerNorm stats remain f32.
        "w1f": w1.reshape(3 * D, F).astype(jnp.bfloat16),
        "w2f": w2.reshape(3 * F, F).astype(jnp.bfloat16),
        "vecs": vecs,
    }


def length_regulator_forward(x, params, alpha=1.0, target=None, mel_max_length=None):
    dp_out = duration_predictor(x, params)                   # [B, T]
    if target is not None:
        assert mel_max_length is not None
        out = length_regulate(x, target, mel_max_length)     # [B, M, D]
        return out, dp_out
    # Inference: round predicted (log-)durations; torch .int() truncates toward
    # zero, then clamp(min=0).
    dur = jnp.maximum(jnp.trunc((jnp.exp(dp_out) - 1.0) * alpha + 0.5),
                      0.0).astype(jnp.int32)
    # TODO(synk): PyTorch sizes the output by the data-dependent max total
    # duration (expand_max_len); JAX needs a static mel_max_length and frames
    # beyond it are truncated. No source-padding mask is applied (matches the
    # given module; masking lives outside it in FastSpeech).
    assert mel_max_length is not None
    out = length_regulate(x, dur, mel_max_length)
    mel_pos = jnp.arange(1, mel_max_length + 1, dtype=jnp.int32)[None, :]
    return out, mel_pos


if __name__ == "__main__":
    B, T, D, M = 2, 8, 32, 24
    key = jax.random.PRNGKey(0)
    kx, kd, kp = jax.random.split(key, 3)

    x = jax.random.normal(kx, (B, T, D), jnp.float32)
    target = jax.random.randint(kd, (B, T), 1, 4, dtype=jnp.int32)  # totals <= 24
    params = init_params(kp, d_model=D, filt=D)

    # training path (target provided)
    out, dp = length_regulator_forward(x, params, target=target, mel_max_length=M)
    jax.block_until_ready((out, dp))
    assert out.shape == (B, M, D) and dp.shape == (B, T)

    # inference path (durations predicted + rounded)
    out2, mel_pos = length_regulator_forward(x, params, alpha=1.0,
                                             target=None, mel_max_length=M)
    jax.block_until_ready((out2, mel_pos))
    assert out2.shape == (B, M, D) and mel_pos.shape == (1, M)

    print("KERNEL_OK")
</pallas_src>

<mosaic_0001>
module attributes {stable_mosaic.version = 11 : i64} {
  func.func @_duration_predictor_kernel(%arg0: i32, %arg1: memref<1x8x32xf32, #tpu.memory_space<vmem>>, %arg2: memref<96x32xbf16, #tpu.memory_space<vmem>>, %arg3: memref<96x32xbf16, #tpu.memory_space<vmem>>, %arg4: memref<8x32xf32, #tpu.memory_space<vmem>>, %arg5: memref<1x8x1xf32, #tpu.memory_space<vmem>>) attributes {dimension_semantics = [#tpu.dimension_semantics<parallel>], iteration_bounds = array<i64: 2>, scalar_prefetch = 0 : i64, scratch_operands = 0 : i64, tpu.core_type = #tpu.core_type<tc>, window_params = [{transform_indices = @transform_0, window_bounds = array<i64: 1, 8, 32>}, {pipeline_mode = #tpu.pipeline_mode<synchronous>, transform_indices = @transform_1, window_bounds = array<i64: 96, 32>}, {pipeline_mode = #tpu.pipeline_mode<synchronous>, transform_indices = @transform_2, window_bounds = array<i64: 96, 32>}, {pipeline_mode = #tpu.pipeline_mode<synchronous>, transform_indices = @transform_3, window_bounds = array<i64: 8, 32>}, {transform_indices = @transform_4, window_bounds = array<i64: 1, 8, 1>}]} {
    %c0 = arith.constant 0 : index
    %c0_0 = arith.constant 0 : index
    %c0_1 = arith.constant 0 : index
    %0 = vector.load %arg1[%c0, %c0_0, %c0_1] : memref<1x8x32xf32, #tpu.memory_space<vmem>>, vector<1x8x32xf32>
    %1 = vector.shape_cast %0 : vector<1x8x32xf32> to vector<8x32xf32>
    %2 = tpu.iota {dimensions = array<i32: 0>} : vector<8x1xi32>
    %c0_i32 = arith.constant 0 : i32
    %3 = vector.broadcast %c0_i32 : i32 to vector<8x1xi32>
    %4 = arith.cmpi ne, %2, %3 : vector<8x1xi32>
    %c7_i32 = arith.constant 7 : i32
    %5 = vector.broadcast %c7_i32 : i32 to vector<8x1xi32>
    %6 = arith.cmpi ne, %2, %5 : vector<8x1xi32>
    %c0_2 = arith.constant 0 : index
    %c0_3 = arith.constant 0 : index
    %7 = vector.load %arg4[%c0_2, %c0_3] : memref<8x32xf32, #tpu.memory_space<vmem>>, vector<8x32xf32>
    %8 = vector.extract_strided_slice %7 {offsets = [0, 0], sizes = [1, 32], strides = [1, 1]} : vector<8x32xf32> to vector<1x32xf32>
    %9 = vector.extract_strided_slice %7 {offsets = [1, 0], sizes = [1, 32], strides = [1, 1]} : vector<8x32xf32> to vector<1x32xf32>
    %10 = vector.extract_strided_slice %7 {offsets = [2, 0], sizes = [1, 32], strides = [1, 1]} : vector<8x32xf32> to vector<1x32xf32>
    %cst = arith.constant 0.000000e+00 : f32
    %11 = vector.broadcast %cst : f32 to vector<8x32xf32>
    %c1_i32 = arith.constant 1 : i32
    %12 = tpu.dynamic_rotate %1 by %c1_i32 dim 0 : vector<8x32xf32>, i32 -> vector<8x32xf32>
    %13 = vector.shape_cast %4 : vector<8x1xi1> to vector<8x1xi1>
    %14 = vector.broadcast %13 : vector<8x1xi1> to vector<8x32xi1>
    %15 = arith.select %14, %12, %11 : vector<8x32xi1>, vector<8x32xf32>
    %c7_i32_4 = arith.constant 7 : i32
    %16 = tpu.dynamic_rotate %1 by %c7_i32_4 dim 0 : vector<8x32xf32>, i32 -> vector<8x32xf32>
    %17 = vector.shape_cast %6 : vector<8x1xi1> to vector<8x1xi1>
    %18 = vector.broadcast %17 : vector<8x1xi1> to vector<8x32xi1>
    %19 = arith.select %18, %16, %11 : vector<8x32xi1>, vector<8x32xf32>
    %20 = tpu.concatenate %15, %1, %19 in 1 : vector<8x32xf32>, vector<8x32xf32>, vector<8x32xf32> -> vector<8x96xf32>
    %21 = arith.truncf %20 : vector<8x96xf32> to vector<8x96xbf16>
    %c0_5 = arith.constant 0 : index
    %c0_6 = arith.constant 0 : index
    %22 = vector.load %arg2[%c0_5, %c0_6] : memref<96x32xbf16, #tpu.memory_space<vmem>>, vector<96x32xbf16>
    %cst_7 = arith.constant dense<0.000000e+00> : vector<8x32xf32>
    %23 = tpu.matmul %21, %22, %cst_7 {dimension_numbers = #tpu.dot_dimension_numbers<[1], [0], [0], [1], [0, 0, 1, 1], [], []>} : vector<8x96xbf16>, vector<96x32xbf16>, vector<8x32xf32> -> vector<8x32xf32>
    %24 = vector.broadcast %8 : vector<1x32xf32> to vector<8x32xf32>
    %25 = arith.addf %23, %24 : vector<8x32xf32>
    %cst_8 = arith.constant 0.000000e+00 : f32
    %26 = vector.broadcast %cst_8 : f32 to vector<8x32xf32>
    %27 = arith.maximumf %25, %26 : vector<8x32xf32>
    %cst_9 = arith.constant dense<0.000000e+00> : vector<8xf32>
    %28 = vector.multi_reduction <add>, %27, %cst_9 [1] : vector<8x32xf32> to vector<8xf32>
    %29 = vector.shape_cast %28 : vector<8xf32> to vector<8x1xf32>
    %cst_10 = arith.constant 3.200000e+01 : f32
    %30 = vector.broadcast %cst_10 : f32 to vector<8x1xf32>
    %31 = arith.divf %29, %30 : vector<8x1xf32>
    %32 = arith.mulf %27, %27 : vector<8x32xf32>
    %cst_11 = arith.constant dense<0.000000e+00> : vector<8xf32>
    %33 = vector.multi_reduction <add>, %32, %cst_11 [1] : vector<8x32xf32> to vector<8xf32>
    %34 = vector.shape_cast %33 : vector<8xf32> to vector<8x1xf32>
    %cst_12 = arith.constant 3.200000e+01 : f32
    %35 = vector.broadcast %cst_12 : f32 to vector<8x1xf32>
    %36 = arith.divf %34, %35 : vector<8x1xf32>
    %37 = arith.mulf %31, %31 : vector<8x1xf32>
    %38 = arith.subf %36, %37 : vector<8x1xf32>
    %cst_13 = arith.constant 0.000000e+00 : f32
    %39 = vector.broadcast %cst_13 : f32 to vector<8x1xf32>
    %40 = arith.maximumf %38, %39 : vector<8x1xf32>
    %41 = vector.broadcast %31 : vector<8x1xf32> to vector<8x32xf32>
    %42 = arith.subf %27, %41 : vector<8x32xf32>
    %cst_14 = arith.constant 9.99999974E-6 : f32
    %43 = vector.broadcast %cst_14 : f32 to vector<8x1xf32>
    %44 = arith.addf %40, %43 : vector<8x1xf32>
    %45 = math.rsqrt %44 : vector<8x1xf32>
    %46 = vector.broadcast %45 : vector<8x1xf32> to vector<8x32xf32>
    %47 = arith.mulf %42, %46 : vector<8x32xf32>
    %48 = vector.broadcast %9 : vector<1x32xf32> to vector<8x32xf32>
    %49 = arith.mulf %47, %48 : vector<8x32xf32>
    %50 = vector.broadcast %10 : vector<1x32xf32> to vector<8x32xf32>
    %51 = arith.addf %49, %50 : vector<8x32xf32>
    %52 = vector.extract_strided_slice %7 {offsets = [3, 0], sizes = [1, 32], strides = [1, 1]} : vector<8x32xf32> to vector<1x32xf32>
    %53 = vector.extract_strided_slice %7 {offsets = [4, 0], sizes = [1, 32], strides = [1, 1]} : vector<8x32xf32> to vector<1x32xf32>
    %54 = vector.extract_strided_slice %7 {offsets = [5, 0], sizes = [1, 32], strides = [1, 1]} : vector<8x32xf32> to vector<1x32xf32>
    %cst_15 = arith.constant 0.000000e+00 : f32
    %55 = vector.broadcast %cst_15 : f32 to vector<8x32xf32>
    %c1_i32_16 = arith.constant 1 : i32
    %56 = tpu.dynamic_rotate %51 by %c1_i32_16 dim 0 : vector<8x32xf32>, i32 -> vector<8x32xf32>
    %57 = vector.shape_cast %4 : vector<8x1xi1> to vector<8x1xi1>
    %58 = vector.broadcast %57 : vector<8x1xi1> to vector<8x32xi1>
    %59 = arith.select %58, %56, %55 : vector<8x32xi1>, vector<8x32xf32>
    %c7_i32_17 = arith.constant 7 : i32
    %60 = tpu.dynamic_rotate %51 by %c7_i32_17 dim 0 : vector<8x32xf32>, i32 -> vector<8x32xf32>
    %61 = vector.shape_cast %6 : vector<8x1xi1> to vector<8x1xi1>
    %62 = vector.broadcast %61 : vector<8x1xi1> to vector<8x32xi1>
    %63 = arith.select %62, %60, %55 : vector<8x32xi1>, vector<8x32xf32>
    %64 = tpu.concatenate %59, %51, %63 in 1 : vector<8x32xf32>, vector<8x32xf32>, vector<8x32xf32> -> vector<8x96xf32>
    %65 = arith.truncf %64 : vector<8x96xf32> to vector<8x96xbf16>
    %c0_18 = arith.constant 0 : index
    %c0_19 = arith.constant 0 : index
    %66 = vector.load %arg3[%c0_18, %c0_19] : memref<96x32xbf16, #tpu.memory_space<vmem>>, vector<96x32xbf16>
    %cst_20 = arith.constant dense<0.000000e+00> : vector<8x32xf32>
    %67 = tpu.matmul %65, %66, %cst_20 {dimension_numbers = #tpu.dot_dimension_numbers<[1], [0], [0], [1], [0, 0, 1, 1], [], []>} : vector<8x96xbf16>, vector<96x32xbf16>, vector<8x32xf32> -> vector<8x32xf32>
    %68 = vector.broadcast %52 : vector<1x32xf32> to vector<8x32xf32>
    %69 = arith.addf %67, %68 : vector<8x32xf32>
    %cst_21 = arith.constant 0.000000e+00 : f32
    %70 = vector.broadcast %cst_21 : f32 to vector<8x32xf32>
    %71 = arith.maximumf %69, %70 : vector<8x32xf32>
    %cst_22 = arith.constant dense<0.000000e+00> : vector<8xf32>
    %72 = vector.multi_reduction <add>, %71, %cst_22 [1] : vector<8x32xf32> to vector<8xf32>
    %73 = vector.shape_cast %72 : vector<8xf32> to vector<8x1xf32>
    %cst_23 = arith.constant 3.200000e+01 : f32
    %74 = vector.broadcast %cst_23 : f32 to vector<8x1xf32>
    %75 = arith.divf %73, %74 : vector<8x1xf32>
    %76 = arith.mulf %71, %71 : vector<8x32xf32>
    %cst_24 = arith.constant dense<0.000000e+00> : vector<8xf32>
    %77 = vector.multi_reduction <add>, %76, %cst_24 [1] : vector<8x32xf32> to vector<8xf32>
    %78 = vector.shape_cast %77 : vector<8xf32> to vector<8x1xf32>
    %cst_25 = arith.constant 3.200000e+01 : f32
    %79 = vector.broadcast %cst_25 : f32 to vector<8x1xf32>
    %80 = arith.divf %78, %79 : vector<8x1xf32>
    %81 = arith.mulf %75, %75 : vector<8x1xf32>
    %82 = arith.subf %80, %81 : vector<8x1xf32>
    %cst_26 = arith.constant 0.000000e+00 : f32
    %83 = vector.broadcast %cst_26 : f32 to vector<8x1xf32>
    %84 = arith.maximumf %82, %83 : vector<8x1xf32>
    %85 = vector.broadcast %75 : vector<8x1xf32> to vector<8x32xf32>
    %86 = arith.subf %71, %85 : vector<8x32xf32>
    %cst_27 = arith.constant 9.99999974E-6 : f32
    %87 = vector.broadcast %cst_27 : f32 to vector<8x1xf32>
    %88 = arith.addf %84, %87 : vector<8x1xf32>
    %89 = math.rsqrt %88 : vector<8x1xf32>
    %90 = vector.broadcast %89 : vector<8x1xf32> to vector<8x32xf32>
    %91 = arith.mulf %86, %90 : vector<8x32xf32>
    %92 = vector.broadcast %53 : vector<1x32xf32> to vector<8x32xf32>
    %93 = arith.mulf %91, %92 : vector<8x32xf32>
    %94 = vector.broadcast %54 : vector<1x32xf32> to vector<8x32xf32>
    %95 = arith.addf %93, %94 : vector<8x32xf32>
    %96 = vector.extract_strided_slice %7 {offsets = [6, 0], sizes = [1, 32], strides = [1, 1]} : vector<8x32xf32> to vector<1x32xf32>
    %97 = vector.broadcast %96 : vector<1x32xf32> to vector<8x32xf32>
    %98 = arith.mulf %95, %97 : vector<8x32xf32>
    %cst_28 = arith.constant dense<0.000000e+00> : vector<8xf32>
    %99 = vector.multi_reduction <add>, %98, %cst_28 [1] : vector<8x32xf32> to vector<8xf32>
    %100 = vector.shape_cast %99 : vector<8xf32> to vector<8x1xf32>
    %101 = vector.extract_strided_slice %7 {offsets = [7, 0], sizes = [1, 1], strides = [1, 1]} : vector<8x32xf32> to vector<1x1xf32>
    %102 = vector.broadcast %101 : vector<1x1xf32> to vector<8x1xf32>
    %103 = arith.addf %100, %102 : vector<8x1xf32>
    %c0_29 = arith.constant 0 : index
    %c0_30 = arith.constant 0 : index
    %c0_31 = arith.constant 0 : index
    %104 = vector.load %arg5[%c0_29, %c0_30, %c0_31] : memref<1x8x1xf32, #tpu.memory_space<vmem>>, vector<1x8x1xf32>
    %105 = vector.shape_cast %104 : vector<1x8x1xf32> to vector<8x1xf32>
    %106 = vector.shape_cast %103 : vector<8x1xf32> to vector<1x8x1xf32>
    tpu.vector_store %arg5[%c0_29, %c0_30, %c0_31], %106 {strides = array<i32>} : memref<1x8x1xf32, #tpu.memory_space<vmem>>, vector<1x8x1xf32>,
    return
  }
  func.func @transform_0(%arg0: i32) -> (i32, i32, i32) {
    %c0_i32 = arith.constant 0 : i32
    %c0_i32_0 = arith.constant 0 : i32
    %c0_i32_1 = arith.constant 0 : i32
    return %arg0, %c0_i32, %c0_i32_0 : i32, i32, i32
  }
  func.func @transform_1(%arg0: i32) -> (i32, i32) {
    %c0_i32 = arith.constant 0 : i32
    %c0_i32_0 = arith.constant 0 : i32
    %c0_i32_1 = arith.constant 0 : i32
    return %c0_i32, %c0_i32_0 : i32, i32
  }
  func.func @transform_2(%arg0: i32) -> (i32, i32) {
    %c0_i32 = arith.constant 0 : i32
    %c0_i32_0 = arith.constant 0 : i32
    %c0_i32_1 = arith.constant 0 : i32
    return %c0_i32, %c0_i32_0 : i32, i32
  }
  func.func @transform_3(%arg0: i32) -> (i32, i32) {
    %c0_i32 = arith.constant 0 : i32
    %c0_i32_0 = arith.constant 0 : i32
    %c0_i32_1 = arith.constant 0 : i32
    return %c0_i32, %c0_i32_0 : i32, i32
  }
  func.func @transform_4(%arg0: i32) -> (i32, i32, i32) {
    %c0_i32 = arith.constant 0 : i32
    %c0_i32_0 = arith.constant 0 : i32
    %c0_i32_1 = arith.constant 0 : i32
    return %arg0, %c0_i32, %c0_i32_0 : i32, i32, i32
  }
}

</mosaic_0001>

<llo_original>
// kernel: tpu_custom_call.1
$region0: #{tpu_custom_call.1}
  #allocation0 [shape = 'u32[]', space=smem, size = 0x4, offset = 0x4, fixed_abs, tag = 'smem constant byte address 0x4 - core index']
  #allocation1 [shape = 'u32[144,128]{1,0:T(1,128)}', space=vmem, size = 0x12000, scoped, tag = 'internal scratch']
  %s0 = inlined_call_operand.vmem [shape: f32[2,8,32], index: 0, kind: input, shape index: {}]
  %s1 = inlined_call_operand.vmem [shape: bf16[96,32], index: 1, kind: input, shape index: {}]
  %s2 = inlined_call_operand.vmem [shape: bf16[96,32], index: 2, kind: input, shape index: {}]
  %s3 = inlined_call_operand.vmem [shape: f32[8,32], index: 3, kind: input, shape index: {}]
  %s4 = inlined_call_operand.vmem [shape: f32[2,8,1], index: 4, kind: output, shape index: {}]
  %s5 = sld [smem:[#allocation0]]
  $region49: #{tpu_custom_call.1} parent=0
    _
  %s7 = ssub.s32 1, %s5
  %s8 = scalar_select 0, %s7, %s5
  loop: start=0, step=1, limit=4
  $region2: #{tpu_custom_call.1} parent=0 // loop_pre_header
    _
  $region3: #{tpu_custom_call.1} parent=0 // loop_header
    %s10 = sphi 0, %s14
    %p11 = scmp.ge.s32.totalorder %s10, 4
    %s20 = sphi 0, %s22
    %s23 = sphi 0, %s20
    %s24 = sphi 0, %s23
    %s40 = sphi 0, %s24
    %s44 = sphi 0, %s44
    %s46 = sphi 0, %s44
    %s47 = sphi 0, %s46
    %s61 = sphi 0, %s47
    %s65 = sphi 0, %s65
    %s67 = sphi 0, %s65
    %s68 = sphi 0, %s67
    %s82 = sphi 0, %s68
    %s86 = sphi 0, %s86
    %s88 = sphi 0, %s86
    %s89 = sphi 0, %s88
    %s103 = sphi 0, %s89
    %s109 = sphi 0, %s111
    %s112 = sphi 0, %s109
    %s113 = sphi 0, %s112
    %s129 = sphi 0, %s113
  $region4: #{tpu_custom_call.1} parent=0 // loop_header_branch
    %13 = sbr.rel (%p11) target = $region8
  $region5: #{tpu_custom_call.1} parent=0 // loop_body
    %s15 = ssub.s32 %s10, 1
    %s16 = ssub.s32 %s10, 2
    %s17 = sadd.s32 %s10, 1
    %s18 = ssub.s32 %s10, %s17
    %p19 = scmp.eq.s32.totalorder %s18, 0
    %s21 = sadd.s32 %s20, 1
    %s22 = scalar_select %p19, %s20, %s21
    %p25 = pneg %p19
    %p26 = scmp.eq.s32.totalorder %s10, 1
    %p27 = por %p25, %p26
    %p28 = scmp.ne.s32.totalorder %s20, %s23
    %p29 = scmp.eq.s32.totalorder %s10, 0
    %p30 = por %p28, %p29
    %p31 = scmp.ne.s32.totalorder %s20, %s23
    %p32 = scmp.eq.s32.totalorder %s15, 1
    %p33 = por %p31, %p32
    %p34 = scmp.ne.s32.totalorder %s23, %s24
    %p35 = scmp.eq.s32.totalorder %s15, 0
    %p36 = por %p34, %p35
    %p37 = scmp.ne.s32.totalorder %s23, %s24
    %p38 = scmp.eq.s32.totalorder %s16, 1
    %p39 = por %p37, %p38
    %p41 = scmp.ne.s32.totalorder %s24, %s40
    %p42 = scmp.eq.s32.totalorder %s16, 0
    %p43 = por %p41, %p42
    %s45 = sadd.s32 %s44, 1
    %p48 = scmp.eq.s32.totalorder %s10, 1
    %p49 = scmp.ne.s32.totalorder %s44, %s46
    %p50 = scmp.eq.s32.totalorder %s10, 0
    %p51 = por %p49, %p50
    %p52 = scmp.ne.s32.totalorder %s44, %s46
    %p53 = scmp.eq.s32.totalorder %s15, 1
    %p54 = por %p52, %p53
    %p55 = scmp.ne.s32.totalorder %s46, %s47
    %p56 = scmp.eq.s32.totalorder %s15, 0
    %p57 = por %p55, %p56
    %p58 = scmp.ne.s32.totalorder %s46, %s47
    %p59 = scmp.eq.s32.totalorder %s16, 1
    %p60 = por %p58, %p59
    %p62 = scmp.ne.s32.totalorder %s47, %s61
    %p63 = scmp.eq.s32.totalorder %s16, 0
    %p64 = por %p62, %p63
    %s66 = sadd.s32 %s65, 1
    %p69 = scmp.eq.s32.totalorder %s10, 1
    %p70 = scmp.ne.s32.totalorder %s65, %s67
    %p71 = scmp.eq.s32.totalorder %s10, 0
    %p72 = por %p70, %p71
    %p73 = scmp.ne.s32.totalorder %s65, %s67
    %p74 = scmp.eq.s32.totalorder %s15, 1
    %p75 = por %p73, %p74
    %p76 = scmp.ne.s32.totalorder %s67, %s68
    %p77 = scmp.eq.s32.totalorder %s15, 0
    %p78 = por %p76, %p77
    %p79 = scmp.ne.s32.totalorder %s67, %s68
    %p80 = scmp.eq.s32.totalorder %s16, 1
    %p81 = por %p79, %p80
    %p83 = scmp.ne.s32.totalorder %s68, %s82
    %p84 = scmp.eq.s32.totalorder %s16, 0
    %p85 = por %p83, %p84
    %s87 = sadd.s32 %s86, 1
    %p90 = scmp.eq.s32.totalorder %s10, 1
    %p91 = scmp.ne.s32.totalorder %s86, %s88
    %p92 = scmp.eq.s32.totalorder %s10, 0
    %p93 = por %p91, %p92
    %p94 = scmp.ne.s32.totalorder %s86, %s88
    %p95 = scmp.eq.s32.totalorder %s15, 1
    %p96 = por %p94, %p95
    %p97 = scmp.ne.s32.totalorder %s88, %s89
    %p98 = scmp.eq.s32.totalorder %s15, 0
    %p99 = por %p97, %p98
    %p100 = scmp.ne.s32.totalorder %s88, %s89
    %p101 = scmp.eq.s32.totalorder %s16, 1
    %p102 = por %p100, %p101
    %p104 = scmp.ne.s32.totalorder %s89, %s103
    %p105 = scmp.eq.s32.totalorder %s16, 0
    %p106 = por %p104, %p105
    %s107 = ssub.s32 %s10, %s17
    %p108 = scmp.eq.s32.totalorder %s107, 0
    %s110 = sadd.s32 %s109, 1
    %s111 = scalar_select %p108, %s109, %s110
    %p114 = pneg %p108
    %p115 = scmp.eq.s32.totalorder %s10, 1
    %p116 = por %p114, %p115
    %p117 = scmp.ne.s32.totalorder %s109, %s112
    %p118 = scmp.eq.s32.totalorder %s10, 0
    %p119 = por %p117, %p118
    %p120 = scmp.ne.s32.totalorder %s109, %s112
    %p121 = scmp.eq.s32.totalorder %s15, 1
    %p122 = por %p120, %p121
    %p123 = scmp.ne.s32.totalorder %s112, %s113
    %p124 = scmp.eq.s32.totalorder %s15, 0
    %p125 = por %p123, %p124
    %p126 = scmp.ne.s32.totalorder %s112, %s113
    %p127 = scmp.eq.s32.totalorder %s16, 1
    %p128 = por %p126, %p127
    %p130 = scmp.ne.s32.totalorder %s113, %s129
    %p131 = scmp.eq.s32.totalorder %s16, 0
    %p132 = por %p130, %p131
    %p133 = scmp.le.s32.totalorder 1, %s10
    %p134 = scmp.lt.s32.totalorder %s10, 3
    %p135 = pnand %p133, %p134
    %p136 = pneg %p135
    // Predicated region
    $region9: #{tpu_custom_call.1} parent=5 // pred_check
      _
    $region10: #{tpu_custom_call.1} parent=5 // pred_check_branch
      %138 = sbr.rel (%p135) target = $region12
    $region11: #{tpu_custom_call.1} parent=5 // pred_region
      %s139 = ssub.s32 %s10, 1
      // Predicated region
      $region13: #{tpu_custom_call.1} parent=11 // pred_check
        %p140 = pneg %p57
      $region14: #{tpu_custom_call.1} parent=11 // pred_check_branch
        %142 = sbr.rel (%p140) target = $region16
      $region15: #{tpu_custom_call.1} parent=11 // pred_region
        _
      $region16: #{tpu_custom_call.1} parent=11 // pred_fallthru
        _
      // Predicated region
      $region17: #{tpu_custom_call.1} parent=11 // pred_check
        %p143 = pneg %p78
      $region18: #{tpu_custom_call.1} parent=11 // pred_check_branch
        %145 = sbr.rel (%p143) target = $region20
      $region19: #{tpu_custom_call.1} parent=11 // pred_region
        _
      $region20: #{tpu_custom_call.1} parent=11 // pred_fallthru
        _
      // Predicated region
      $region21: #{tpu_custom_call.1} parent=11 // pred_check
        %p146 = pneg %p99
      $region22: #{tpu_custom_call.1} parent=11 // pred_check_branch
        %148 = sbr.rel (%p146) target = $region24
      $region23: #{tpu_custom_call.1} parent=11 // pred_region
        _
      $region24: #{tpu_custom_call.1} parent=11 // pred_fallthru
        _
    $region12: #{tpu_custom_call.1} parent=5 // pred_fallthru
      _
    %p149 = scmp.lt.s32.totalorder %s10, 2
    // Predicated region
    $region25: #{tpu_custom_call.1} parent=5 // pred_check
      %p150 = pneg %p149
    $region26: #{tpu_custom_call.1} parent=5 // pred_check_branch
      %152 = sbr.rel (%p150) target = $region28
    $region27: #{tpu_custom_call.1} parent=5 // pred_region
      // Predicated region
      $region29: #{tpu_custom_call.1} parent=27 // pred_check
        %p153 = pneg %p30
      $region30: #{tpu_custom_call.1} parent=27 // pred_check_branch
        %155 = sbr.rel (%p153) target = $region32
      $region31: #{tpu_custom_call.1} parent=27 // pred_region
        %p156 = scmp.lt.s32.totalorder %s10, 1
        %s157 = scalar_select %p156, %s10, 1
        %s158 = smul.addr %s157, 8
        %s159 = scalar_lea.vmem %s0, %s158
      $region32: #{tpu_custom_call.1} parent=27 // pred_fallthru
        _
    $region28: #{tpu_custom_call.1} parent=5 // pred_fallthru
      _
    %p160 = scmp.le.s32.totalorder 1, %s10
    %p161 = scmp.lt.s32.totalorder %s10, 3
    %p162 = pnand %p160, %p161
    %p163 = pneg %p162
    // Predicated region
    $region33: #{tpu_custom_call.1} parent=5 // pred_check
      _
    $region34: #{tpu_custom_call.1} parent=5 // pred_check_branch
      %165 = sbr.rel (%p162) target = $region36
    $region35: #{tpu_custom_call.1} parent=5 // pred_region
      %s166 = ssub.s32 %s10, 1
      %p167 = scmp.lt.s32.totalorder %s15, 1
      %s168 = scalar_select %p167, %s15, 1
      %s169 = smul.addr %s168, 8
      %s170 = scalar_lea.vmem %s0, %s169
      %p171 = pneg %p36
      %p172 = pneg %p33
      %p173 = pneg %p57
      %p174 = pneg %p54
      %p175 = pneg %p78
      %p176 = pneg %p75
      %p177 = pneg %p99
      %p178 = pneg %p96
      %p179 = pneg %p125
      %p180 = pneg %p122
      %p181 = scmp.lt.s32.totalorder %s15, 1
      %s182 = scalar_select %p181, %s15, 1
      %s183 = smul.addr %s182, 8
      %s184 = scalar_lea.vmem %s4, %s183
      %p185 = scmp.lt.s32.totalorder %s15, 1
      %s186 = scalar_select %p185, %s15, 1
      %s187 = smul.addr %s186, 8
      %s188 = scalar_lea.vmem %s0, %s187
      %p189 = scmp.lt.s32.totalorder %s15, 1
      %s190 = scalar_select %p189, %s15, 1
      %s191 = smul.addr %s190, 8
      %s192 = scalar_lea.vmem %s4, %s191
      %v194 = vld [vmem:[%s188] sm:$0xff]
      %v195 = vlaneseq
      %v196 = vshrl.u32 %v195, 7
      %vm197 = vcmp.ne.s32.totalorder %v196, 0
      %vm198 = vcmp.ne.s32.totalorder %v196, 7
      %v199 = vld [vmem:[%s3] sm:$0xff]
      %v200 = vrot.slane %v194, 7
      %v201 = vsel %vm197, 1, 0
      %vm202 = vcmp.eq.s32.totalorder %v201, 1
      %v203 = vsel %vm202, %v200, 0.0
      %v204 = vrot.slane %v194, 1
      %v205 = vsel %vm198, 1, 0
      %vm206 = vcmp.eq.s32.totalorder %v205, 1
      %v207 = vsel %vm206, %v204, 0.0
      %209 = vrot.lane.b32.xlu0 %v194, 32
      %v210 = vpop.permute.xlu0 %209
      %213 = vrot.lane.b32.xlu0 %v207, 64
      %v214 = vpop.permute.xlu0 %213
      %vm216 = vcmask 261120
      %v217 = vsel %vm216, %v203, %v210
      %vm218 = vcmask 523264
      %v219 = vsel %vm218, %v217, %v214
      %v220 = vpack.c.bf16 %v219, %v219
      %v221 = vld [vmem:[%s1] sm:$0xf]
      %v222 = vld [vmem:[%s1 + $0x4] sm:$0xf]
      %v223 = vld [vmem:[%s1 + $0x8] sm:$0xf]
      %v224 = vld [vmem:[%s1 + $0xc] sm:$0xf]
      %v225 = vld [vmem:[%s1 + $0x10] sm:$0xf]
      %v226 = vld [vmem:[%s1 + $0x14] sm:$0xf]
      %v227 = vld [vmem:[%s1 + $0x18] sm:$0xf]
      %v228 = vld [vmem:[%s1 + $0x1c] sm:$0xf]
      %v229 = vld [vmem:[%s1 + $0x20] sm:$0xf]
      %v230 = vld [vmem:[%s1 + $0x24] sm:$0xf]
      %v231 = vld [vmem:[%s1 + $0x28] sm:$0xf]
      %v232 = vld [vmem:[%s1 + $0x2c] sm:$0xf]
      %v233 = vlaneseq
      %v234 = vshrl.u32 %v233, 7
      %v235 = vsub.s32 0, %v234
      %v236 = vrot.slane %v199, %v235
      %v249 = vunpack.c.l.b16 %v221
      %v250 = vunpack.c.l.b16 %v222
      %v251 = vunpack.c.l.b16 %v223
      %v252 = vunpack.c.l.b16 %v224
      %v253 = vunpack.c.l.b16 %v225
      %v254 = vunpack.c.l.b16 %v226
      %v255 = vunpack.c.l.b16 %v227
      %v256 = vunpack.c.l.b16 %v228
      %v257 = vunpack.c.l.b16 %v229
      %v258 = vunpack.c.l.b16 %v230
      %v259 = vunpack.c.l.b16 %v231
      %v260 = vunpack.c.l.b16 %v232
      %v261 = vpack.c.b16 %v250, %v249
      %v262 = vpack.c.b16 %v252, %v251
      %v263 = vpack.c.b16 %v254, %v253
      %v264 = vpack.c.b16 %v256, %v255
      %v265 = vpack.c.b16 %v258, %v257
      %v266 = vpack.c.b16 %v260, %v259
      %vm273 = vcmask 785408
      %v275 = vsel %vm273, %v220, 0
      %277 = vmatprep.subr.bf16.mxu0 0
      %278 = vmatpush1.bf16.msra.mxu0 %v261
      %279 = vmatprep.subr.bf16.mxu0 0
      %280 = vmatpush1.bf16.msra.mxu0 %v262
      %281 = vmatprep.subr.bf16.mxu0 0
      %282 = vmatpush1.bf16.msra.mxu0 %v263
      %283 = vmatprep.subr.bf16.mxu0 0
      %284 = vmatpush1.bf16.msra.mxu0 %v264
      %285 = vmatprep.subr.bf16.mxu0 0
      %286 = vmatpush1.bf16.msra.mxu0 %v265
      %287 = vmatprep.subr.bf16.mxu0 0
      %288 = vmatpush1.bf16.msra.mxu0 %v266
      %289 = vmatprep.subr.bf16.mxu0 0
      %290 = vmatpush1.bf16.msra.mxu0 0
      %291 = vmatprep.subr.bf16.mxu0 0
      %292 = vmatpush1.bf16.msra.mxu0 0
      %293 = vmatprep.subr.bf16.mxu0 0
      %294 = vmatpush1.bf16.msra.mxu0 0
      %295 = vmatprep.subr.bf16.mxu0 0
      %296 = vmatpush1.bf16.msra.mxu0 0
      %297 = vmatprep.subr.bf16.mxu0 0
      %298 = vmatpush1.bf16.msra.mxu0 0
      %299 = vmatprep.subr.bf16.mxu0 0
      %300 = vmatpush1.bf16.msra.mxu0 0
      %301 = vmatprep.subr.bf16.mxu0 0
      %302 = vmatpush1.bf16.msra.mxu0 0
      %303 = vmatprep.subr.bf16.mxu0 0
      %304 = vmatpush1.bf16.msra.mxu0 0
      %305 = vmatprep.subr.bf16.mxu0 0
      %306 = vmatpush1.bf16.msra.mxu0 0
      %307 = vmatprep.subr.bf16.mxu0 0
      %308 = vmatpush1.bf16.msra.mxu0 0
      %309 = vmatprep.mubr.bf16.mxu0 0
      %310 = vmatmul.mubr.bf16.gmra.mrb[0].mxu0 %v275
      %v311 = vpop.f32.mrb[0].mxu0
      %v312 = vadd.f32 %v236, %v311
      %v313 = vpop.f32.mrb[0].mxu0
      %v314 = vpop.f32.mrb[0].mxu0
      %v315 = vpop.f32.mrb[0].mxu0
      %316 = vdwg.mxu0
      %v317 = vmax.f32 %v312, 0.0
      %v318 = vsel %vm216, %v317, 0.0
      %319 = vadd.xlane.f32.xlu0 %v318
      %v320 = vpop.xlane.xlu0 %319
      %v321 = vrcp.pop 32.0
      %v322 = vmul.f32 %v320, %v321
      %v323 = vmul.f32 %v317, %v317
      %v324 = vsel %vm216, %v323, 0.0
      %325 = vadd.xlane.f32.xlu0 %v324
      %v326 = vpop.xlane.xlu0 %325
      %v327 = vmul.f32 %v326, %v321
      %v328 = vmul.f32 %v322, %v322
      %v329 = vsub.f32 %v327, %v328
      %v330 = vmax.f32 %v329, 0.0
      %v331 = vsub.f32 %v317, %v322
      %v332 = vadd.f32 %v330, 1e-05
      %v333 = vrsqrt.pop %v332
      %v334 = vmul.f32 %v331, %v333
      %v335 = vlaneseq
      %v336 = vshrl.u32 %v335, 7
      %v337 = vsub.s32 1, %v336
      %v338 = vrot.slane %v199, %v337
      %v339 = vmul.f32 %v334, %v338
      %v340 = vlaneseq
      %v341 = vshrl.u32 %v340, 7
      %v342 = vsub.s32 2, %v341
      %v343 = vrot.slane %v199, %v342
      %v344 = vadd.f32 %v339, %v343
      %v345 = vrot.slane %v344, 7
      %v346 = vsel %vm202, %v345, 0.0
      %v347 = vrot.slane %v344, 1
      %v348 = vsel %vm206, %v347, 0.0
      %350 = vrot.lane.b32.xlu0 %v344, 32
      %v351 = vpop.permute.xlu0 %350
      %354 = vrot.lane.b32.xlu0 %v348, 64
      %v355 = vpop.permute.xlu0 %354
      %v357 = vsel %vm216, %v346, %v351
      %v358 = vsel %vm218, %v357, %v355
      %v359 = vpack.c.bf16 %v358, %v358
      %v360 = vld [vmem:[%s2] sm:$0xf]
      %v361 = vld [vmem:[%s2 + $0x4] sm:$0xf]
      %v362 = vld [vmem:[%s2 + $0x8] sm:$0xf]
      %v363 = vld [vmem:[%s2 + $0xc] sm:$0xf]
      %v364 = vld [vmem:[%s2 + $0x10] sm:$0xf]
      %v365 = vld [vmem:[%s2 + $0x14] sm:$0xf]
      %v366 = vld [vmem:[%s2 + $0x18] sm:$0xf]
      %v367 = vld [vmem:[%s2 + $0x1c] sm:$0xf]
      %v368 = vld [vmem:[%s2 + $0x20] sm:$0xf]
      %v369 = vld [vmem:[%s2 + $0x24] sm:$0xf]
      %v370 = vld [vmem:[%s2 + $0x28] sm:$0xf]
      %v371 = vld [vmem:[%s2 + $0x2c] sm:$0xf]
      %v372 = vlaneseq
      %v373 = vshrl.u32 %v372, 7
      %v374 = vsub.s32 3, %v373
      %v375 = vrot.slane %v199, %v374
      %v388 = vunpack.c.l.b16 %v360
      %v389 = vunpack.c.l.b16 %v361
      %v390 = vunpack.c.l.b16 %v362
      %v391 = vunpack.c.l.b16 %v363
      %v392 = vunpack.c.l.b16 %v364
      %v393 = vunpack.c.l.b16 %v365
      %v394 = vunpack.c.l.b16 %v366
      %v395 = vunpack.c.l.b16 %v367
      %v396 = vunpack.c.l.b16 %v368
      %v397 = vunpack.c.l.b16 %v369
      %v398 = vunpack.c.l.b16 %v370
      %v399 = vunpack.c.l.b16 %v371
      %v400 = vpack.c.b16 %v389, %v388
      %v401 = vpack.c.b16 %v391, %v390
      %v402 = vpack.c.b16 %v393, %v392
      %v403 = vpack.c.b16 %v395, %v394
      %v404 = vpack.c.b16 %v397, %v396
      %v405 = vpack.c.b16 %v399, %v398
      %v413 = vsel %vm273, %v359, 0
      %415 = vmatprep.subr.bf16.mxu0 0
      %416 = vmatpush1.bf16.msra.mxu0 %v400
      %417 = vmatprep.subr.bf16.mxu0 0
      %418 = vmatpush1.bf16.msra.mxu0 %v401
      %419 = vmatprep.subr.bf16.mxu0 0
      %420 = vmatpush1.bf16.msra.mxu0 %v402
      %421 = vmatprep.subr.bf16.mxu0 0
      %422 = vmatpush1.bf16.msra.mxu0 %v403
      %423 = vmatprep.subr.bf16.mxu0 0
      %424 = vmatpush1.bf16.msra.mxu0 %v404
      %425 = vmatprep.subr.bf16.mxu0 0
      %426 = vmatpush1.bf16.msra.mxu0 %v405
      %427 = vmatprep.subr.bf16.mxu0 0
      %428 = vmatpush1.bf16.msra.mxu0 0
      %429 = vmatprep.subr.bf16.mxu0 0
      %430 = vmatpush1.bf16.msra.mxu0 0
      %431 = vmatprep.subr.bf16.mxu0 0
      %432 = vmatpush1.bf16.msra.mxu0 0
      %433 = vmatprep.subr.bf16.mxu0 0
      %434 = vmatpush1.bf16.msra.mxu0 0
      %435 = vmatprep.subr.bf16.mxu0 0
      %436 = vmatpush1.bf16.msra.mxu0 0
      %437 = vmatprep.subr.bf16.mxu0 0
      %438 = vmatpush1.bf16.msra.mxu0 0
      %439 = vmatprep.subr.bf16.mxu0 0
      %440 = vmatpush1.bf16.msra.mxu0 0
      %441 = vmatprep.subr.bf16.mxu0 0
      %442 = vmatpush1.bf16.msra.mxu0 0
      %443 = vmatprep.subr.bf16.mxu0 0
      %444 = vmatpush1.bf16.msra.mxu0 0
      %445 = vmatprep.subr.bf16.mxu0 0
      %446 = vmatpush1.bf16.msra.mxu0 0
      %447 = vmatprep.mubr.bf16.mxu0 0
      %448 = vmatmul.mubr.bf16.gmra.mrb[0].mxu0 %v413
      %v449 = vpop.f32.mrb[0].mxu0
      %v450 = vadd.f32 %v375, %v449
      %v451 = vpop.f32.mrb[0].mxu0
      %v452 = vpop.f32.mrb[0].mxu0
      %v453 = vpop.f32.mrb[0].mxu0
      %454 = vdwg.mxu0
      %v455 = vmax.f32 %v450, 0.0
      %v456 = vsel %vm216, %v455, 0.0
      %457 = vadd.xlane.f32.xlu0 %v456
      %v458 = vpop.xlane.xlu0 %457
      %v459 = vmul.f32 %v458, %v321
      %v460 = vmul.f32 %v455, %v455
      %v461 = vsel %vm216, %v460, 0.0
      %462 = vadd.xlane.f32.xlu0 %v461
      %v463 = vpop.xlane.xlu0 %462
      %v464 = vmul.f32 %v463, %v321
      %v465 = vmul.f32 %v459, %v459
      %v466 = vsub.f32 %v464, %v465
      %v467 = vmax.f32 %v466, 0.0
      %v468 = vsub.f32 %v455, %v459
      %v469 = vadd.f32 %v467, 1e-05
      %v470 = vrsqrt.pop %v469
      %v471 = vmul.f32 %v468, %v470
      %v472 = vlaneseq
      %v473 = vshrl.u32 %v472, 7
      %v474 = vsub.s32 4, %v473
      %v475 = vrot.slane %v199, %v474
      %v476 = vmul.f32 %v471, %v475
      %v477 = vlaneseq
      %v478 = vshrl.u32 %v477, 7
      %v479 = vsub.s32 5, %v478
      %v480 = vrot.slane %v199, %v479
      %v481 = vadd.f32 %v476, %v480
      %v482 = vlaneseq
      %v483 = vshrl.u32 %v482, 7
      %v484 = vsub.s32 6, %v483
      %v485 = vrot.slane %v199, %v484
      %v486 = vmul.f32 %v481, %v485
      %v487 = vsel %vm216, %v486, 0.0
      %488 = vadd.xlane.f32.xlu0 %v487
      %v489 = vpop.xlane.xlu0 %488
      %v490 = vlaneseq
      %v491 = vshrl.u32 %v490, 7
      %v492 = vsub.s32 7, %v491
      %v493 = vrot.slane %v199, %v492
      %v494 = vadd.f32 %v489, %v493
      %vm495 = vcmask 7168
      %496 = vst.msk [vmem:[%s192] sm:$0xff] %vm495, %v494
      %p497 = scmp.lt.s32.totalorder %s15, 1
      %s498 = scalar_select %p497, %s15, 1
      %s499 = smul.addr %s498, 8
      %s500 = scalar_lea.vmem %s4, %s499
      // Predicated region
      $region37: #{tpu_custom_call.1} parent=35 // pred_check
        %p501 = pneg %p122
      $region38: #{tpu_custom_call.1} parent=35 // pred_check_branch
        %503 = sbr.rel (%p501) target = $region40
      $region39: #{tpu_custom_call.1} parent=35 // pred_region
        _
      $region40: #{tpu_custom_call.1} parent=35 // pred_fallthru
        _
    $region36: #{tpu_custom_call.1} parent=5 // pred_fallthru
      _
    %p504 = scmp.le.s32.totalorder 2, %s10
    // Predicated region
    $region41: #{tpu_custom_call.1} parent=5 // pred_check
      %p505 = pneg %p504
    $region42: #{tpu_custom_call.1} parent=5 // pred_check_branch
      %507 = sbr.rel (%p505) target = $region44
    $region43: #{tpu_custom_call.1} parent=5 // pred_region
      %s508 = ssub.s32 %s10, 2
      // Predicated region
      $region45: #{tpu_custom_call.1} parent=43 // pred_check
        %p509 = pneg %p128
      $region46: #{tpu_custom_call.1} parent=43 // pred_check_branch
        %511 = sbr.rel (%p509) target = $region48
      $region47: #{tpu_custom_call.1} parent=43 // pred_region
        %p512 = scmp.lt.s32.totalorder %s16, 1
        %s513 = scalar_select %p512, %s16, 1
        %s514 = smul.addr %s513, 8
        %s515 = scalar_lea.vmem %s4, %s514
      $region48: #{tpu_custom_call.1} parent=43 // pred_fallthru
        _
    $region44: #{tpu_custom_call.1} parent=5 // pred_fallthru
      _
  $region6: #{tpu_custom_call.1} parent=0 // loop_footer
    %s14 = sadd.s32 1, %s10
  $region7: #{tpu_custom_call.1} parent=0 // loop_footer_branch
    %9 = sbr.rel target = $region3
  $region8: #{tpu_custom_call.1} parent=0 // loop_exit
    _

</llo_original>
